<compile_context>
chip_gen: v7x
topology: tpu7x:2x2x1
jax: 0.10.0
libtpu: 0.0.40
codegen_flags: <defaults>
</compile_context>

<pallas_src>
import numpy as np

import jax
import jax.numpy as jnp
from jax.experimental import pallas as pl
from jax.experimental.pallas import tpu as pltpu

BN_EPS = 1e-5
KH, KW = 7, 3          # conv kernel (height, width)
PH, PW = 3, 1          # conv padding (height, width)


# ----------------------------------------------------------------------------
# Fused kernel builder
# ----------------------------------------------------------------------------
def _make_fused_kernel(H2, W2):
    """Fused pool -> (conv+BN+ReLU) x 2 kernel for pooled size (H2, W2)."""

    def conv_bn_relu(a, w, b, g, be, mask):
        # a:    (C, M)            activation; lanes = flattened (n, h, w)
        # w:    (Cout, KH*KW*C)   im2col weight matrix
        # b,g,be: (Cout, 1)       conv bias, BN gamma, BN beta
        # mask: (KH*KW*C, M)      0/1 zero-padding mask for each tap row
        taps = []
        for kh in range(KH):
            for kw in range(KW):
                d = (kh - PH) * W2 + (kw - PW)     # lane shift for this tap
                taps.append(a if d == 0 else jnp.roll(a, -d, axis=1))
        patches = jnp.concatenate(taps, axis=0) * mask            # (K, M)
        z = jnp.dot(w, patches, preferred_element_type=jnp.float32) + b
        # BatchNorm2d training-mode stats: biased mean/var over (N, H, W),
        # i.e. over the lane axis.  Two-pass form for numerical stability.
        mean = jnp.mean(z, axis=1, keepdims=True)
        zc = z - mean
        var = jnp.mean(zc * zc, axis=1, keepdims=True)
        scale = g * jax.lax.rsqrt(var + BN_EPS)
        return jnp.maximum(zc * scale + be, 0.0)                  # (Cout, M)

    def kernel(x_ref, w1_ref, b1_ref, g1_ref, be1_ref, m1_ref,
               w2_ref, b2_ref, g2_ref, be2_ref, m2_ref, o_ref):
        # Fused MaxPool2d(2): four dense (Cin, M) slabs, elementwise max.
        a = jnp.maximum(jnp.maximum(x_ref[0, 0], x_ref[0, 1]),
                        jnp.maximum(x_ref[1, 0], x_ref[1, 1]))
        a = conv_bn_relu(a, w1_ref[...], b1_ref[...], g1_ref[...],
                         be1_ref[...], m1_ref[...])
        a = conv_bn_relu(a, w2_ref[...], b2_ref[...], g2_ref[...],
                         be2_ref[...], m2_ref[...])
        o_ref[...] = a                         # single lane-dense (Cout, M) store

    return kernel


def _full_spec(shape):
    nd = len(shape)
    return pl.BlockSpec(tuple(int(s) for s in shape), lambda i: (0,) * nd)


# ----------------------------------------------------------------------------
# Wrapper
# ----------------------------------------------------------------------------
def down_7x3_forward(x_nchw, params):
    """params: list of 2 tuples (w_oihw, bias, gamma, beta). Returns NCHW."""
    N, Cin, H, W = (int(s) for s in x_nchw.shape)
    H2, W2 = H // 2, W // 2
    M = N * H2 * W2
    out_ch = int(params[-1][0].shape[0])

    # Layout plumbing (tiny, wrapper-side): expose the 2x2 pool windows on two
    # leading axes and flatten (n, h, w) onto the lane axis.
    xr = (x_nchw.astype(jnp.float32)
          .reshape(N, Cin, H2, 2, W2, 2)
          .transpose(3, 5, 1, 0, 2, 4)              # (2, 2, Cin, N, H2, W2)
          .reshape(2, 2, Cin, M))

    # Static 0/1 zero-padding masks for the 21 conv taps (numpy constants).
    lane = np.arange(M)
    hh = (lane // W2) % H2
    ww = lane % W2
    tap_masks = []
    for kh in range(KH):
        for kw in range(KW):
            dh, dw = kh - PH, kw - PW
            valid = ((hh + dh >= 0) & (hh + dh < H2) &
                     (ww + dw >= 0) & (ww + dw < W2))
            tap_masks.append(valid)
    tap_masks = np.stack(tap_masks).astype(np.float32)            # (KH*KW, M)

    args = [xr]
    for (w_oihw, bias, gamma, beta) in params:
        co, ci = int(w_oihw.shape[0]), int(w_oihw.shape[1])
        wm = (jnp.asarray(w_oihw, jnp.float32)
              .transpose(0, 2, 3, 1)                # (Cout, KH, KW, Cin)
              .reshape(co, KH * KW * ci))           # rows match patch ordering
        mask = jnp.asarray(np.repeat(tap_masks, ci, axis=0))       # (K, M)
        args += [wm,
                 jnp.asarray(bias, jnp.float32).reshape(co, 1),
                 jnp.asarray(gamma, jnp.float32).reshape(co, 1),
                 jnp.asarray(beta, jnp.float32).reshape(co, 1),
                 mask]

    kernel = _make_fused_kernel(H2, W2)
    out = pl.pallas_call(
        kernel,
        out_shape=jax.ShapeDtypeStruct((out_ch, M), jnp.float32),
        grid=(1,),
        in_specs=[_full_spec(a.shape) for a in args],
        out_specs=pl.BlockSpec((out_ch, M), lambda i: (0, 0)),
        compiler_params=pltpu.CompilerParams(
            dimension_semantics=("arbitrary",)),
    )(*args)

    # (Cout, N*H2*W2) -> NCHW
    return out.reshape(out_ch, N, H2, W2).transpose(1, 0, 2, 3)


# ----------------------------------------------------------------------------
# Pure-JAX reference (correctness check)
# ----------------------------------------------------------------------------
def reference_forward(x_nchw, params):
    x = jax.lax.reduce_window(x_nchw, -jnp.inf, jax.lax.max,
                              (1, 1, 2, 2), (1, 1, 2, 2), "VALID")
    for (w_oihw, bias, gamma, beta) in params:
        z = jax.lax.conv_general_dilated(
            x, w_oihw, window_strides=(1, 1), padding=((PH, PH), (PW, PW)),
            dimension_numbers=("NCHW", "OIHW", "NCHW"))
        z = z + bias.reshape(1, -1, 1, 1)
        mean = jnp.mean(z, axis=(0, 2, 3), keepdims=True)
        var = jnp.var(z, axis=(0, 2, 3), keepdims=True)
        zhat = (z - mean) / jnp.sqrt(var + BN_EPS)
        x = jnp.maximum(gamma.reshape(1, -1, 1, 1) * zhat
                        + beta.reshape(1, -1, 1, 1), 0.0)
    return x


# ----------------------------------------------------------------------------
# Main
# ----------------------------------------------------------------------------
if __name__ == "__main__":
    in_ch, out_ch = 4, 8
    N, H, W = 2, 16, 16

    key = jax.random.PRNGKey(0)
    keys = jax.random.split(key, 9)

    x = jax.random.normal(keys[0], (N, in_ch, H, W), dtype=jnp.float32)

    def make_layer(k_w, k_b, k_g, k_beta, cin, cout):
        w = 0.15 * jax.random.normal(k_w, (cout, cin, KH, KW), dtype=jnp.float32)
        b = 0.10 * jax.random.normal(k_b, (cout,), dtype=jnp.float32)
        gamma = 1.0 + 0.10 * jax.random.normal(k_g, (cout,), dtype=jnp.float32)
        beta = 0.10 * jax.random.normal(k_beta, (cout,), dtype=jnp.float32)
        return (w, b, gamma, beta)

    params = [
        make_layer(keys[1], keys[2], keys[3], keys[4], in_ch, out_ch),
        make_layer(keys[5], keys[6], keys[7], keys[8], out_ch, out_ch),
    ]

    out = jax.block_until_ready(down_7x3_forward(x, params))
    ref = jax.block_until_ready(reference_forward(x, params))

    assert out.shape == (N, out_ch, H // 2, W // 2), out.shape
    max_err = float(jnp.max(jnp.abs(out - ref)))
    assert jnp.allclose(out, ref, rtol=1e-3, atol=5e-3), max_err

    print("KERNEL_OK")
</pallas_src>

<mosaic_0001>
module attributes {stable_mosaic.version = 11 : i64} {
  func.func @kernel(%arg0: i32, %arg1: memref<2x2x4x128xf32, #tpu.memory_space<vmem>>, %arg2: memref<8x84xf32, #tpu.memory_space<vmem>>, %arg3: memref<8x1xf32, #tpu.memory_space<vmem>>, %arg4: memref<8x1xf32, #tpu.memory_space<vmem>>, %arg5: memref<8x1xf32, #tpu.memory_space<vmem>>, %arg6: memref<84x128xf32, #tpu.memory_space<vmem>>, %arg7: memref<8x168xf32, #tpu.memory_space<vmem>>, %arg8: memref<8x1xf32, #tpu.memory_space<vmem>>, %arg9: memref<8x1xf32, #tpu.memory_space<vmem>>, %arg10: memref<8x1xf32, #tpu.memory_space<vmem>>, %arg11: memref<168x128xf32, #tpu.memory_space<vmem>>, %arg12: memref<8x128xf32, #tpu.memory_space<vmem>>) attributes {dimension_semantics = [#tpu.dimension_semantics<arbitrary>], iteration_bounds = array<i64: 1>, scalar_prefetch = 0 : i64, scratch_operands = 0 : i64, tpu.core_type = #tpu.core_type<tc>, window_params = [{pipeline_mode = #tpu.pipeline_mode<synchronous>, transform_indices = @transform_0, window_bounds = array<i64: 2, 2, 4, 128>}, {pipeline_mode = #tpu.pipeline_mode<synchronous>, transform_indices = @transform_1, window_bounds = array<i64: 8, 84>}, {pipeline_mode = #tpu.pipeline_mode<synchronous>, transform_indices = @transform_2, window_bounds = array<i64: 8, 1>}, {pipeline_mode = #tpu.pipeline_mode<synchronous>, transform_indices = @transform_3, window_bounds = array<i64: 8, 1>}, {pipeline_mode = #tpu.pipeline_mode<synchronous>, transform_indices = @transform_4, window_bounds = array<i64: 8, 1>}, {pipeline_mode = #tpu.pipeline_mode<synchronous>, transform_indices = @transform_5, window_bounds = array<i64: 84, 128>}, {pipeline_mode = #tpu.pipeline_mode<synchronous>, transform_indices = @transform_6, window_bounds = array<i64: 8, 168>}, {pipeline_mode = #tpu.pipeline_mode<synchronous>, transform_indices = @transform_7, window_bounds = array<i64: 8, 1>}, {pipeline_mode = #tpu.pipeline_mode<synchronous>, transform_indices = @transform_8, window_bounds = array<i64: 8, 1>}, {pipeline_mode = #tpu.pipeline_mode<synchronous>, transform_indices = @transform_9, window_bounds = array<i64: 8, 1>}, {pipeline_mode = #tpu.pipeline_mode<synchronous>, transform_indices = @transform_10, window_bounds = array<i64: 168, 128>}, {pipeline_mode = #tpu.pipeline_mode<synchronous>, transform_indices = @transform_11, window_bounds = array<i64: 8, 128>}]} {
    %c0 = arith.constant 0 : index
    %c0_0 = arith.constant 0 : index
    %c0_1 = arith.constant 0 : index
    %c0_2 = arith.constant 0 : index
    %0 = vector.load %arg1[%c0, %c0_0, %c0_1, %c0_2] : memref<2x2x4x128xf32, #tpu.memory_space<vmem>>, vector<1x1x4x128xf32>
    %1 = vector.shape_cast %0 : vector<1x1x4x128xf32> to vector<4x128xf32>
    %c0_3 = arith.constant 0 : index
    %c1 = arith.constant 1 : index
    %c0_4 = arith.constant 0 : index
    %c0_5 = arith.constant 0 : index
    %2 = vector.load %arg1[%c0_3, %c1, %c0_4, %c0_5] : memref<2x2x4x128xf32, #tpu.memory_space<vmem>>, vector<1x1x4x128xf32>
    %3 = vector.shape_cast %2 : vector<1x1x4x128xf32> to vector<4x128xf32>
    %4 = arith.maximumf %1, %3 : vector<4x128xf32>
    %c1_6 = arith.constant 1 : index
    %c0_7 = arith.constant 0 : index
    %c0_8 = arith.constant 0 : index
    %c0_9 = arith.constant 0 : index
    %5 = vector.load %arg1[%c1_6, %c0_7, %c0_8, %c0_9] : memref<2x2x4x128xf32, #tpu.memory_space<vmem>>, vector<1x1x4x128xf32>
    %6 = vector.shape_cast %5 : vector<1x1x4x128xf32> to vector<4x128xf32>
    %c1_10 = arith.constant 1 : index
    %c1_11 = arith.constant 1 : index
    %c0_12 = arith.constant 0 : index
    %c0_13 = arith.constant 0 : index
    %7 = vector.load %arg1[%c1_10, %c1_11, %c0_12, %c0_13] : memref<2x2x4x128xf32, #tpu.memory_space<vmem>>, vector<1x1x4x128xf32>
    %8 = vector.shape_cast %7 : vector<1x1x4x128xf32> to vector<4x128xf32>
    %9 = arith.maximumf %6, %8 : vector<4x128xf32>
    %10 = arith.maximumf %4, %9 : vector<4x128xf32>
    %c0_14 = arith.constant 0 : index
    %c0_15 = arith.constant 0 : index
    %11 = vector.load %arg2[%c0_14, %c0_15] : memref<8x84xf32, #tpu.memory_space<vmem>>, vector<8x84xf32>
    %c0_16 = arith.constant 0 : index
    %c0_17 = arith.constant 0 : index
    %12 = vector.load %arg3[%c0_16, %c0_17] : memref<8x1xf32, #tpu.memory_space<vmem>>, vector<8x1xf32>
    %c0_18 = arith.constant 0 : index
    %c0_19 = arith.constant 0 : index
    %13 = vector.load %arg4[%c0_18, %c0_19] : memref<8x1xf32, #tpu.memory_space<vmem>>, vector<8x1xf32>
    %c0_20 = arith.constant 0 : index
    %c0_21 = arith.constant 0 : index
    %14 = vector.load %arg5[%c0_20, %c0_21] : memref<8x1xf32, #tpu.memory_space<vmem>>, vector<8x1xf32>
    %c0_22 = arith.constant 0 : index
    %c0_23 = arith.constant 0 : index
    %15 = vector.load %arg6[%c0_22, %c0_23] : memref<84x128xf32, #tpu.memory_space<vmem>>, vector<84x128xf32>
    %16 = vector.extract_strided_slice %10 {offsets = [0, 103], sizes = [4, 25], strides = [1, 1]} : vector<4x128xf32> to vector<4x25xf32>
    %17 = vector.extract_strided_slice %10 {offsets = [0, 0], sizes = [4, 103], strides = [1, 1]} : vector<4x128xf32> to vector<4x103xf32>
    %18 = tpu.concatenate %16, %17 in 1 : vector<4x25xf32>, vector<4x103xf32> -> vector<4x128xf32>
    %19 = vector.extract_strided_slice %10 {offsets = [0, 104], sizes = [4, 24], strides = [1, 1]} : vector<4x128xf32> to vector<4x24xf32>
    %20 = vector.extract_strided_slice %10 {offsets = [0, 0], sizes = [4, 104], strides = [1, 1]} : vector<4x128xf32> to vector<4x104xf32>
    %21 = tpu.concatenate %19, %20 in 1 : vector<4x24xf32>, vector<4x104xf32> -> vector<4x128xf32>
    %22 = vector.extract_strided_slice %10 {offsets = [0, 105], sizes = [4, 23], strides = [1, 1]} : vector<4x128xf32> to vector<4x23xf32>
    %23 = vector.extract_strided_slice %10 {offsets = [0, 0], sizes = [4, 105], strides = [1, 1]} : vector<4x128xf32> to vector<4x105xf32>
    %24 = tpu.concatenate %22, %23 in 1 : vector<4x23xf32>, vector<4x105xf32> -> vector<4x128xf32>
    %25 = vector.extract_strided_slice %10 {offsets = [0, 111], sizes = [4, 17], strides = [1, 1]} : vector<4x128xf32> to vector<4x17xf32>
    %26 = vector.extract_strided_slice %10 {offsets = [0, 0], sizes = [4, 111], strides = [1, 1]} : vector<4x128xf32> to vector<4x111xf32>
    %27 = tpu.concatenate %25, %26 in 1 : vector<4x17xf32>, vector<4x111xf32> -> vector<4x128xf32>
    %28 = vector.extract_strided_slice %10 {offsets = [0, 112], sizes = [4, 16], strides = [1, 1]} : vector<4x128xf32> to vector<4x16xf32>
    %29 = vector.extract_strided_slice %10 {offsets = [0, 0], sizes = [4, 112], strides = [1, 1]} : vector<4x128xf32> to vector<4x112xf32>
    %30 = tpu.concatenate %28, %29 in 1 : vector<4x16xf32>, vector<4x112xf32> -> vector<4x128xf32>
    %31 = vector.extract_strided_slice %10 {offsets = [0, 113], sizes = [4, 15], strides = [1, 1]} : vector<4x128xf32> to vector<4x15xf32>
    %32 = vector.extract_strided_slice %10 {offsets = [0, 0], sizes = [4, 113], strides = [1, 1]} : vector<4x128xf32> to vector<4x113xf32>
    %33 = tpu.concatenate %31, %32 in 1 : vector<4x15xf32>, vector<4x113xf32> -> vector<4x128xf32>
    %34 = vector.extract_strided_slice %10 {offsets = [0, 119], sizes = [4, 9], strides = [1, 1]} : vector<4x128xf32> to vector<4x9xf32>
    %35 = vector.extract_strided_slice %10 {offsets = [0, 0], sizes = [4, 119], strides = [1, 1]} : vector<4x128xf32> to vector<4x119xf32>
    %36 = tpu.concatenate %34, %35 in 1 : vector<4x9xf32>, vector<4x119xf32> -> vector<4x128xf32>
    %37 = vector.extract_strided_slice %10 {offsets = [0, 120], sizes = [4, 8], strides = [1, 1]} : vector<4x128xf32> to vector<4x8xf32>
    %38 = vector.extract_strided_slice %10 {offsets = [0, 0], sizes = [4, 120], strides = [1, 1]} : vector<4x128xf32> to vector<4x120xf32>
    %39 = tpu.concatenate %37, %38 in 1 : vector<4x8xf32>, vector<4x120xf32> -> vector<4x128xf32>
    %40 = vector.extract_strided_slice %10 {offsets = [0, 121], sizes = [4, 7], strides = [1, 1]} : vector<4x128xf32> to vector<4x7xf32>
    %41 = vector.extract_strided_slice %10 {offsets = [0, 0], sizes = [4, 121], strides = [1, 1]} : vector<4x128xf32> to vector<4x121xf32>
    %42 = tpu.concatenate %40, %41 in 1 : vector<4x7xf32>, vector<4x121xf32> -> vector<4x128xf32>
    %43 = vector.extract_strided_slice %10 {offsets = [0, 127], sizes = [4, 1], strides = [1, 1]} : vector<4x128xf32> to vector<4x1xf32>
    %44 = vector.extract_strided_slice %10 {offsets = [0, 0], sizes = [4, 127], strides = [1, 1]} : vector<4x128xf32> to vector<4x127xf32>
    %45 = tpu.concatenate %43, %44 in 1 : vector<4x1xf32>, vector<4x127xf32> -> vector<4x128xf32>
    %46 = vector.extract_strided_slice %10 {offsets = [0, 1], sizes = [4, 127], strides = [1, 1]} : vector<4x128xf32> to vector<4x127xf32>
    %47 = vector.extract_strided_slice %10 {offsets = [0, 0], sizes = [4, 1], strides = [1, 1]} : vector<4x128xf32> to vector<4x1xf32>
    %48 = tpu.concatenate %46, %47 in 1 : vector<4x127xf32>, vector<4x1xf32> -> vector<4x128xf32>
    %49 = vector.extract_strided_slice %10 {offsets = [0, 7], sizes = [4, 121], strides = [1, 1]} : vector<4x128xf32> to vector<4x121xf32>
    %50 = vector.extract_strided_slice %10 {offsets = [0, 0], sizes = [4, 7], strides = [1, 1]} : vector<4x128xf32> to vector<4x7xf32>
    %51 = tpu.concatenate %49, %50 in 1 : vector<4x121xf32>, vector<4x7xf32> -> vector<4x128xf32>
    %52 = vector.extract_strided_slice %10 {offsets = [0, 8], sizes = [4, 120], strides = [1, 1]} : vector<4x128xf32> to vector<4x120xf32>
    %53 = vector.extract_strided_slice %10 {offsets = [0, 0], sizes = [4, 8], strides = [1, 1]} : vector<4x128xf32> to vector<4x8xf32>
    %54 = tpu.concatenate %52, %53 in 1 : vector<4x120xf32>, vector<4x8xf32> -> vector<4x128xf32>
    %55 = vector.extract_strided_slice %10 {offsets = [0, 9], sizes = [4, 119], strides = [1, 1]} : vector<4x128xf32> to vector<4x119xf32>
    %56 = vector.extract_strided_slice %10 {offsets = [0, 0], sizes = [4, 9], strides = [1, 1]} : vector<4x128xf32> to vector<4x9xf32>
    %57 = tpu.concatenate %55, %56 in 1 : vector<4x119xf32>, vector<4x9xf32> -> vector<4x128xf32>
    %58 = vector.extract_strided_slice %10 {offsets = [0, 15], sizes = [4, 113], strides = [1, 1]} : vector<4x128xf32> to vector<4x113xf32>
    %59 = vector.extract_strided_slice %10 {offsets = [0, 0], sizes = [4, 15], strides = [1, 1]} : vector<4x128xf32> to vector<4x15xf32>
    %60 = tpu.concatenate %58, %59 in 1 : vector<4x113xf32>, vector<4x15xf32> -> vector<4x128xf32>
    %61 = vector.extract_strided_slice %10 {offsets = [0, 16], sizes = [4, 112], strides = [1, 1]} : vector<4x128xf32> to vector<4x112xf32>
    %62 = vector.extract_strided_slice %10 {offsets = [0, 0], sizes = [4, 16], strides = [1, 1]} : vector<4x128xf32> to vector<4x16xf32>
    %63 = tpu.concatenate %61, %62 in 1 : vector<4x112xf32>, vector<4x16xf32> -> vector<4x128xf32>
    %64 = vector.extract_strided_slice %10 {offsets = [0, 17], sizes = [4, 111], strides = [1, 1]} : vector<4x128xf32> to vector<4x111xf32>
    %65 = vector.extract_strided_slice %10 {offsets = [0, 0], sizes = [4, 17], strides = [1, 1]} : vector<4x128xf32> to vector<4x17xf32>
    %66 = tpu.concatenate %64, %65 in 1 : vector<4x111xf32>, vector<4x17xf32> -> vector<4x128xf32>
    %67 = vector.extract_strided_slice %10 {offsets = [0, 23], sizes = [4, 105], strides = [1, 1]} : vector<4x128xf32> to vector<4x105xf32>
    %68 = vector.extract_strided_slice %10 {offsets = [0, 0], sizes = [4, 23], strides = [1, 1]} : vector<4x128xf32> to vector<4x23xf32>
    %69 = tpu.concatenate %67, %68 in 1 : vector<4x105xf32>, vector<4x23xf32> -> vector<4x128xf32>
    %70 = vector.extract_strided_slice %10 {offsets = [0, 24], sizes = [4, 104], strides = [1, 1]} : vector<4x128xf32> to vector<4x104xf32>
    %71 = vector.extract_strided_slice %10 {offsets = [0, 0], sizes = [4, 24], strides = [1, 1]} : vector<4x128xf32> to vector<4x24xf32>
    %72 = tpu.concatenate %70, %71 in 1 : vector<4x104xf32>, vector<4x24xf32> -> vector<4x128xf32>
    %73 = vector.extract_strided_slice %10 {offsets = [0, 25], sizes = [4, 103], strides = [1, 1]} : vector<4x128xf32> to vector<4x103xf32>
    %74 = vector.extract_strided_slice %10 {offsets = [0, 0], sizes = [4, 25], strides = [1, 1]} : vector<4x128xf32> to vector<4x25xf32>
    %75 = tpu.concatenate %73, %74 in 1 : vector<4x103xf32>, vector<4x25xf32> -> vector<4x128xf32>
    %76 = tpu.concatenate %18, %21, %24, %27, %30, %33, %36, %39, %42, %45, %10, %48, %51, %54, %57, %60 in 0 : vector<4x128xf32>, vector<4x128xf32>, vector<4x128xf32>, vector<4x128xf32>, vector<4x128xf32>, vector<4x128xf32>, vector<4x128xf32>, vector<4x128xf32>, vector<4x128xf32>, vector<4x128xf32>, vector<4x128xf32>, vector<4x128xf32>, vector<4x128xf32>, vector<4x128xf32>, vector<4x128xf32>, vector<4x128xf32> -> vector<64x128xf32>
    %77 = tpu.concatenate %63, %66, %69, %72, %75 in 0 : vector<4x128xf32>, vector<4x128xf32>, vector<4x128xf32>, vector<4x128xf32>, vector<4x128xf32> -> vector<20x128xf32>
    %78 = tpu.concatenate %76, %77 in 0 : vector<64x128xf32>, vector<20x128xf32> -> vector<84x128xf32>
    %79 = arith.mulf %78, %15 : vector<84x128xf32>
    %cst = arith.constant dense<0.000000e+00> : vector<8x128xf32>
    %80 = tpu.matmul %11, %79, %cst {dimension_numbers = #tpu.dot_dimension_numbers<[1], [0], [0], [1], [0, 0, 1, 1], [], []>} : vector<8x84xf32>, vector<84x128xf32>, vector<8x128xf32> -> vector<8x128xf32>
    %81 = vector.broadcast %12 : vector<8x1xf32> to vector<8x128xf32>
    %82 = arith.addf %80, %81 : vector<8x128xf32>
    %cst_24 = arith.constant dense<0.000000e+00> : vector<8xf32>
    %83 = vector.multi_reduction <add>, %82, %cst_24 [1] : vector<8x128xf32> to vector<8xf32>
    %84 = vector.shape_cast %83 : vector<8xf32> to vector<8x1xf32>
    %cst_25 = arith.constant 1.280000e+02 : f32
    %85 = vector.broadcast %cst_25 : f32 to vector<8x1xf32>
    %86 = arith.divf %84, %85 : vector<8x1xf32>
    %87 = vector.broadcast %86 : vector<8x1xf32> to vector<8x128xf32>
    %88 = arith.subf %82, %87 : vector<8x128xf32>
    %89 = arith.mulf %88, %88 : vector<8x128xf32>
    %cst_26 = arith.constant dense<0.000000e+00> : vector<8xf32>
    %90 = vector.multi_reduction <add>, %89, %cst_26 [1] : vector<8x128xf32> to vector<8xf32>
    %91 = vector.shape_cast %90 : vector<8xf32> to vector<8x1xf32>
    %cst_27 = arith.constant 1.280000e+02 : f32
    %92 = vector.broadcast %cst_27 : f32 to vector<8x1xf32>
    %93 = arith.divf %91, %92 : vector<8x1xf32>
    %cst_28 = arith.constant 9.99999974E-6 : f32
    %94 = vector.broadcast %cst_28 : f32 to vector<8x1xf32>
    %95 = arith.addf %93, %94 : vector<8x1xf32>
    %96 = math.rsqrt %95 : vector<8x1xf32>
    %97 = arith.mulf %13, %96 : vector<8x1xf32>
    %98 = vector.broadcast %97 : vector<8x1xf32> to vector<8x128xf32>
    %99 = arith.mulf %88, %98 : vector<8x128xf32>
    %100 = vector.broadcast %14 : vector<8x1xf32> to vector<8x128xf32>
    %101 = arith.addf %99, %100 : vector<8x128xf32>
    %cst_29 = arith.constant 0.000000e+00 : f32
    %102 = vector.broadcast %cst_29 : f32 to vector<8x128xf32>
    %103 = arith.maximumf %101, %102 : vector<8x128xf32>
    %c0_30 = arith.constant 0 : index
    %c0_31 = arith.constant 0 : index
    %104 = vector.load %arg7[%c0_30, %c0_31] : memref<8x168xf32, #tpu.memory_space<vmem>>, vector<8x168xf32>
    %c0_32 = arith.constant 0 : index
    %c0_33 = arith.constant 0 : index
    %105 = vector.load %arg8[%c0_32, %c0_33] : memref<8x1xf32, #tpu.memory_space<vmem>>, vector<8x1xf32>
    %c0_34 = arith.constant 0 : index
    %c0_35 = arith.constant 0 : index
    %106 = vector.load %arg9[%c0_34, %c0_35] : memref<8x1xf32, #tpu.memory_space<vmem>>, vector<8x1xf32>
    %c0_36 = arith.constant 0 : index
    %c0_37 = arith.constant 0 : index
    %107 = vector.load %arg10[%c0_36, %c0_37] : memref<8x1xf32, #tpu.memory_space<vmem>>, vector<8x1xf32>
    %c0_38 = arith.constant 0 : index
    %c0_39 = arith.constant 0 : index
    %108 = vector.load %arg11[%c0_38, %c0_39] : memref<168x128xf32, #tpu.memory_space<vmem>>, vector<168x128xf32>
    %109 = vector.extract_strided_slice %103 {offsets = [0, 103], sizes = [8, 25], strides = [1, 1]} : vector<8x128xf32> to vector<8x25xf32>
    %110 = vector.extract_strided_slice %103 {offsets = [0, 0], sizes = [8, 103], strides = [1, 1]} : vector<8x128xf32> to vector<8x103xf32>
    %111 = tpu.concatenate %109, %110 in 1 : vector<8x25xf32>, vector<8x103xf32> -> vector<8x128xf32>
    %112 = vector.extract_strided_slice %103 {offsets = [0, 104], sizes = [8, 24], strides = [1, 1]} : vector<8x128xf32> to vector<8x24xf32>
    %113 = vector.extract_strided_slice %103 {offsets = [0, 0], sizes = [8, 104], strides = [1, 1]} : vector<8x128xf32> to vector<8x104xf32>
    %114 = tpu.concatenate %112, %113 in 1 : vector<8x24xf32>, vector<8x104xf32> -> vector<8x128xf32>
    %115 = vector.extract_strided_slice %103 {offsets = [0, 105], sizes = [8, 23], strides = [1, 1]} : vector<8x128xf32> to vector<8x23xf32>
    %116 = vector.extract_strided_slice %103 {offsets = [0, 0], sizes = [8, 105], strides = [1, 1]} : vector<8x128xf32> to vector<8x105xf32>
    %117 = tpu.concatenate %115, %116 in 1 : vector<8x23xf32>, vector<8x105xf32> -> vector<8x128xf32>
    %118 = vector.extract_strided_slice %103 {offsets = [0, 111], sizes = [8, 17], strides = [1, 1]} : vector<8x128xf32> to vector<8x17xf32>
    %119 = vector.extract_strided_slice %103 {offsets = [0, 0], sizes = [8, 111], strides = [1, 1]} : vector<8x128xf32> to vector<8x111xf32>
    %120 = tpu.concatenate %118, %119 in 1 : vector<8x17xf32>, vector<8x111xf32> -> vector<8x128xf32>
    %121 = vector.extract_strided_slice %103 {offsets = [0, 112], sizes = [8, 16], strides = [1, 1]} : vector<8x128xf32> to vector<8x16xf32>
    %122 = vector.extract_strided_slice %103 {offsets = [0, 0], sizes = [8, 112], strides = [1, 1]} : vector<8x128xf32> to vector<8x112xf32>
    %123 = tpu.concatenate %121, %122 in 1 : vector<8x16xf32>, vector<8x112xf32> -> vector<8x128xf32>
    %124 = vector.extract_strided_slice %103 {offsets = [0, 113], sizes = [8, 15], strides = [1, 1]} : vector<8x128xf32> to vector<8x15xf32>
    %125 = vector.extract_strided_slice %103 {offsets = [0, 0], sizes = [8, 113], strides = [1, 1]} : vector<8x128xf32> to vector<8x113xf32>
    %126 = tpu.concatenate %124, %125 in 1 : vector<8x15xf32>, vector<8x113xf32> -> vector<8x128xf32>
    %127 = vector.extract_strided_slice %103 {offsets = [0, 119], sizes = [8, 9], strides = [1, 1]} : vector<8x128xf32> to vector<8x9xf32>
    %128 = vector.extract_strided_slice %103 {offsets = [0, 0], sizes = [8, 119], strides = [1, 1]} : vector<8x128xf32> to vector<8x119xf32>
    %129 = tpu.concatenate %127, %128 in 1 : vector<8x9xf32>, vector<8x119xf32> -> vector<8x128xf32>
    %130 = vector.extract_strided_slice %103 {offsets = [0, 120], sizes = [8, 8], strides = [1, 1]} : vector<8x128xf32> to vector<8x8xf32>
    %131 = vector.extract_strided_slice %103 {offsets = [0, 0], sizes = [8, 120], strides = [1, 1]} : vector<8x128xf32> to vector<8x120xf32>
    %132 = tpu.concatenate %130, %131 in 1 : vector<8x8xf32>, vector<8x120xf32> -> vector<8x128xf32>
    %133 = vector.extract_strided_slice %103 {offsets = [0, 121], sizes = [8, 7], strides = [1, 1]} : vector<8x128xf32> to vector<8x7xf32>
    %134 = vector.extract_strided_slice %103 {offsets = [0, 0], sizes = [8, 121], strides = [1, 1]} : vector<8x128xf32> to vector<8x121xf32>
    %135 = tpu.concatenate %133, %134 in 1 : vector<8x7xf32>, vector<8x121xf32> -> vector<8x128xf32>
    %136 = vector.extract_strided_slice %103 {offsets = [0, 127], sizes = [8, 1], strides = [1, 1]} : vector<8x128xf32> to vector<8x1xf32>
    %137 = vector.extract_strided_slice %103 {offsets = [0, 0], sizes = [8, 127], strides = [1, 1]} : vector<8x128xf32> to vector<8x127xf32>
    %138 = tpu.concatenate %136, %137 in 1 : vector<8x1xf32>, vector<8x127xf32> -> vector<8x128xf32>
    %139 = vector.extract_strided_slice %103 {offsets = [0, 1], sizes = [8, 127], strides = [1, 1]} : vector<8x128xf32> to vector<8x127xf32>
    %140 = vector.extract_strided_slice %103 {offsets = [0, 0], sizes = [8, 1], strides = [1, 1]} : vector<8x128xf32> to vector<8x1xf32>
    %141 = tpu.concatenate %139, %140 in 1 : vector<8x127xf32>, vector<8x1xf32> -> vector<8x128xf32>
    %142 = vector.extract_strided_slice %103 {offsets = [0, 7], sizes = [8, 121], strides = [1, 1]} : vector<8x128xf32> to vector<8x121xf32>
    %143 = vector.extract_strided_slice %103 {offsets = [0, 0], sizes = [8, 7], strides = [1, 1]} : vector<8x128xf32> to vector<8x7xf32>
    %144 = tpu.concatenate %142, %143 in 1 : vector<8x121xf32>, vector<8x7xf32> -> vector<8x128xf32>
    %145 = vector.extract_strided_slice %103 {offsets = [0, 8], sizes = [8, 120], strides = [1, 1]} : vector<8x128xf32> to vector<8x120xf32>
    %146 = vector.extract_strided_slice %103 {offsets = [0, 0], sizes = [8, 8], strides = [1, 1]} : vector<8x128xf32> to vector<8x8xf32>
    %147 = tpu.concatenate %145, %146 in 1 : vector<8x120xf32>, vector<8x8xf32> -> vector<8x128xf32>
    %148 = vector.extract_strided_slice %103 {offsets = [0, 9], sizes = [8, 119], strides = [1, 1]} : vector<8x128xf32> to vector<8x119xf32>
    %149 = vector.extract_strided_slice %103 {offsets = [0, 0], sizes = [8, 9], strides = [1, 1]} : vector<8x128xf32> to vector<8x9xf32>
    %150 = tpu.concatenate %148, %149 in 1 : vector<8x119xf32>, vector<8x9xf32> -> vector<8x128xf32>
    %151 = vector.extract_strided_slice %103 {offsets = [0, 15], sizes = [8, 113], strides = [1, 1]} : vector<8x128xf32> to vector<8x113xf32>
    %152 = vector.extract_strided_slice %103 {offsets = [0, 0], sizes = [8, 15], strides = [1, 1]} : vector<8x128xf32> to vector<8x15xf32>
    %153 = tpu.concatenate %151, %152 in 1 : vector<8x113xf32>, vector<8x15xf32> -> vector<8x128xf32>
    %154 = vector.extract_strided_slice %103 {offsets = [0, 16], sizes = [8, 112], strides = [1, 1]} : vector<8x128xf32> to vector<8x112xf32>
    %155 = vector.extract_strided_slice %103 {offsets = [0, 0], sizes = [8, 16], strides = [1, 1]} : vector<8x128xf32> to vector<8x16xf32>
    %156 = tpu.concatenate %154, %155 in 1 : vector<8x112xf32>, vector<8x16xf32> -> vector<8x128xf32>
    %157 = vector.extract_strided_slice %103 {offsets = [0, 17], sizes = [8, 111], strides = [1, 1]} : vector<8x128xf32> to vector<8x111xf32>
    %158 = vector.extract_strided_slice %103 {offsets = [0, 0], sizes = [8, 17], strides = [1, 1]} : vector<8x128xf32> to vector<8x17xf32>
    %159 = tpu.concatenate %157, %158 in 1 : vector<8x111xf32>, vector<8x17xf32> -> vector<8x128xf32>
    %160 = vector.extract_strided_slice %103 {offsets = [0, 23], sizes = [8, 105], strides = [1, 1]} : vector<8x128xf32> to vector<8x105xf32>
    %161 = vector.extract_strided_slice %103 {offsets = [0, 0], sizes = [8, 23], strides = [1, 1]} : vector<8x128xf32> to vector<8x23xf32>
    %162 = tpu.concatenate %160, %161 in 1 : vector<8x105xf32>, vector<8x23xf32> -> vector<8x128xf32>
    %163 = vector.extract_strided_slice %103 {offsets = [0, 24], sizes = [8, 104], strides = [1, 1]} : vector<8x128xf32> to vector<8x104xf32>
    %164 = vector.extract_strided_slice %103 {offsets = [0, 0], sizes = [8, 24], strides = [1, 1]} : vector<8x128xf32> to vector<8x24xf32>
    %165 = tpu.concatenate %163, %164 in 1 : vector<8x104xf32>, vector<8x24xf32> -> vector<8x128xf32>
    %166 = vector.extract_strided_slice %103 {offsets = [0, 25], sizes = [8, 103], strides = [1, 1]} : vector<8x128xf32> to vector<8x103xf32>
    %167 = vector.extract_strided_slice %103 {offsets = [0, 0], sizes = [8, 25], strides = [1, 1]} : vector<8x128xf32> to vector<8x25xf32>
    %168 = tpu.concatenate %166, %167 in 1 : vector<8x103xf32>, vector<8x25xf32> -> vector<8x128xf32>
    %169 = tpu.concatenate %111, %114, %117, %120, %123, %126, %129, %132, %135, %138, %103, %141, %144, %147, %150, %153 in 0 : vector<8x128xf32>, vector<8x128xf32>, vector<8x128xf32>, vector<8x128xf32>, vector<8x128xf32>, vector<8x128xf32>, vector<8x128xf32>, vector<8x128xf32>, vector<8x128xf32>, vector<8x128xf32>, vector<8x128xf32>, vector<8x128xf32>, vector<8x128xf32>, vector<8x128xf32>, vector<8x128xf32>, vector<8x128xf32> -> vector<128x128xf32>
    %170 = tpu.concatenate %156, %159, %162, %165, %168 in 0 : vector<8x128xf32>, vector<8x128xf32>, vector<8x128xf32>, vector<8x128xf32>, vector<8x128xf32> -> vector<40x128xf32>
    %171 = tpu.concatenate %169, %170 in 0 : vector<128x128xf32>, vector<40x128xf32> -> vector<168x128xf32>
    %172 = arith.mulf %171, %108 : vector<168x128xf32>
    %cst_40 = arith.constant dense<0.000000e+00> : vector<8x128xf32>
    %173 = tpu.matmul %104, %172, %cst_40 {dimension_numbers = #tpu.dot_dimension_numbers<[1], [0], [0], [1], [0, 0, 1, 1], [], []>} : vector<8x168xf32>, vector<168x128xf32>, vector<8x128xf32> -> vector<8x128xf32>
    %174 = vector.broadcast %105 : vector<8x1xf32> to vector<8x128xf32>
    %175 = arith.addf %173, %174 : vector<8x128xf32>
    %cst_41 = arith.constant dense<0.000000e+00> : vector<8xf32>
    %176 = vector.multi_reduction <add>, %175, %cst_41 [1] : vector<8x128xf32> to vector<8xf32>
    %177 = vector.shape_cast %176 : vector<8xf32> to vector<8x1xf32>
    %cst_42 = arith.constant 1.280000e+02 : f32
    %178 = vector.broadcast %cst_42 : f32 to vector<8x1xf32>
    %179 = arith.divf %177, %178 : vector<8x1xf32>
    %180 = vector.broadcast %179 : vector<8x1xf32> to vector<8x128xf32>
    %181 = arith.subf %175, %180 : vector<8x128xf32>
    %182 = arith.mulf %181, %181 : vector<8x128xf32>
    %cst_43 = arith.constant dense<0.000000e+00> : vector<8xf32>
    %183 = vector.multi_reduction <add>, %182, %cst_43 [1] : vector<8x128xf32> to vector<8xf32>
    %184 = vector.shape_cast %183 : vector<8xf32> to vector<8x1xf32>
    %cst_44 = arith.constant 1.280000e+02 : f32
    %185 = vector.broadcast %cst_44 : f32 to vector<8x1xf32>
    %186 = arith.divf %184, %185 : vector<8x1xf32>
    %cst_45 = arith.constant 9.99999974E-6 : f32
    %187 = vector.broadcast %cst_45 : f32 to vector<8x1xf32>
    %188 = arith.addf %186, %187 : vector<8x1xf32>
    %189 = math.rsqrt %188 : vector<8x1xf32>
    %190 = arith.mulf %106, %189 : vector<8x1xf32>
    %191 = vector.broadcast %190 : vector<8x1xf32> to vector<8x128xf32>
    %192 = arith.mulf %181, %191 : vector<8x128xf32>
    %193 = vector.broadcast %107 : vector<8x1xf32> to vector<8x128xf32>
    %194 = arith.addf %192, %193 : vector<8x128xf32>
    %cst_46 = arith.constant 0.000000e+00 : f32
    %195 = vector.broadcast %cst_46 : f32 to vector<8x128xf32>
    %196 = arith.maximumf %194, %195 : vector<8x128xf32>
    %c0_47 = arith.constant 0 : index
    %c0_48 = arith.constant 0 : index
    %197 = vector.load %arg12[%c0_47, %c0_48] : memref<8x128xf32, #tpu.memory_space<vmem>>, vector<8x128xf32>
    tpu.vector_store %arg12[%c0_47, %c0_48], %196 {strides = array<i32>} : memref<8x128xf32, #tpu.memory_space<vmem>>, vector<8x128xf32>,
    return
  }
  func.func @transform_0(%arg0: i32) -> (i32, i32, i32, i32) {
    %c0_i32 = arith.constant 0 : i32
    %c0_i32_0 = arith.constant 0 : i32
    %c0_i32_1 = arith.constant 0 : i32
    %c0_i32_2 = arith.constant 0 : i32
    %c0_i32_3 = arith.constant 0 : i32
    return %c0_i32, %c0_i32_0, %c0_i32_1, %c0_i32_2 : i32, i32, i32, i32
  }
  func.func @transform_1(%arg0: i32) -> (i32, i32) {
    %c0_i32 = arith.constant 0 : i32
    %c0_i32_0 = arith.constant 0 : i32
    %c0_i32_1 = arith.constant 0 : i32
    return %c0_i32, %c0_i32_0 : i32, i32
  }
  func.func @transform_2(%arg0: i32) -> (i32, i32) {
    %c0_i32 = arith.constant 0 : i32
    %c0_i32_0 = arith.constant 0 : i32
    %c0_i32_1 = arith.constant 0 : i32
    return %c0_i32, %c0_i32_0 : i32, i32
  }
  func.func @transform_3(%arg0: i32) -> (i32, i32) {
    %c0_i32 = arith.constant 0 : i32
    %c0_i32_0 = arith.constant 0 : i32
    %c0_i32_1 = arith.constant 0 : i32
    return %c0_i32, %c0_i32_0 : i32, i32
  }
  func.func @transform_4(%arg0: i32) -> (i32, i32) {
    %c0_i32 = arith.constant 0 : i32
    %c0_i32_0 = arith.constant 0 : i32
    %c0_i32_1 = arith.constant 0 : i32
    return %c0_i32, %c0_i32_0 : i32, i32
  }
  func.func @transform_5(%arg0: i32) -> (i32, i32) {
    %c0_i32 = arith.constant 0 : i32
    %c0_i32_0 = arith.constant 0 : i32
    %c0_i32_1 = arith.constant 0 : i32
    return %c0_i32, %c0_i32_0 : i32, i32
  }
  func.func @transform_6(%arg0: i32) -> (i32, i32) {
    %c0_i32 = arith.constant 0 : i32
    %c0_i32_0 = arith.constant 0 : i32
    %c0_i32_1 = arith.constant 0 : i32
    return %c0_i32, %c0_i32_0 : i32, i32
  }
  func.func @transform_7(%arg0: i32) -> (i32, i32) {
    %c0_i32 = arith.constant 0 : i32
    %c0_i32_0 = arith.constant 0 : i32
    %c0_i32_1 = arith.constant 0 : i32
    return %c0_i32, %c0_i32_0 : i32, i32
  }
  func.func @transform_8(%arg0: i32) -> (i32, i32) {
    %c0_i32 = arith.constant 0 : i32
    %c0_i32_0 = arith.constant 0 : i32
    %c0_i32_1 = arith.constant 0 : i32
    return %c0_i32, %c0_i32_0 : i32, i32
  }
  func.func @transform_9(%arg0: i32) -> (i32, i32) {
    %c0_i32 = arith.constant 0 : i32
    %c0_i32_0 = arith.constant 0 : i32
    %c0_i32_1 = arith.constant 0 : i32
    return %c0_i32, %c0_i32_0 : i32, i32
  }
  func.func @transform_10(%arg0: i32) -> (i32, i32) {
    %c0_i32 = arith.constant 0 : i32
    %c0_i32_0 = arith.constant 0 : i32
    %c0_i32_1 = arith.constant 0 : i32
    return %c0_i32, %c0_i32_0 : i32, i32
  }
  func.func @transform_11(%arg0: i32) -> (i32, i32) {
    %c0_i32 = arith.constant 0 : i32
    %c0_i32_0 = arith.constant 0 : i32
    %c0_i32_1 = arith.constant 0 : i32
    return %c0_i32, %c0_i32_0 : i32, i32
  }
}

</mosaic_0001>

<llo_original>
// kernel: tpu_custom_call.1
$region0: #{tpu_custom_call.1}
  #allocation0 [shape = 'u32[]', space=smem, size = 0x4, offset = 0x4, fixed_abs, tag = 'smem constant byte address 0x4 - core index']
  #allocation1 [shape = 'u32[144,128]{1,0:T(1,128)}', space=vmem, size = 0x12000, scoped, tag = 'internal scratch']
  %s0 = inlined_call_operand.vmem [shape: f32[2,2,4,128], index: 0, kind: input, shape index: {}]
  %s1 = inlined_call_operand.vmem [shape: f32[8,84], index: 1, kind: input, shape index: {}]
  %s2 = inlined_call_operand.vmem [shape: f32[8,1], index: 2, kind: input, shape index: {}]
  %s3 = inlined_call_operand.vmem [shape: f32[8,1], index: 3, kind: input, shape index: {}]
  %s4 = inlined_call_operand.vmem [shape: f32[8,1], index: 4, kind: input, shape index: {}]
  %s5 = inlined_call_operand.hbm [shape: f32[84,128], index: 5, kind: input, shape index: {}]
  %s6 = inlined_call_operand.vmem [shape: f32[8,168], index: 6, kind: input, shape index: {}]
  %s7 = inlined_call_operand.vmem [shape: f32[8,1], index: 7, kind: input, shape index: {}]
  %s8 = inlined_call_operand.vmem [shape: f32[8,1], index: 8, kind: input, shape index: {}]
  %s9 = inlined_call_operand.vmem [shape: f32[8,1], index: 9, kind: input, shape index: {}]
  %s10 = inlined_call_operand.hbm [shape: f32[168,128], index: 10, kind: input, shape index: {}]
  %s11 = inlined_call_operand.hbm [shape: f32[8,128], index: 11, kind: output, shape index: {}]
  %s12 = sld [smem:[#allocation0]]
  $region62: #{tpu_custom_call.1} parent=0
    _
  %s14 = ssub.s32 1, %s12
  %s15 = scalar_select 0, %s14, %s12
  $region1: #{tpu_custom_call.1} parent=0
    #allocation2 [shape = 'u8[45056]{0}', space=vmem, size = 0xb000, scoped, tag = 'input window, operand 5, single buffered']
    #allocation3 [shape = 's32[1]{0}', space=sflag, size = 0x4, scoped, tag = 'scoped memory for tpu_custom_call.1']
    #allocation4 [shape = 's32[1]{0}', space=sflag, size = 0x4, scoped, tag = 'scoped memory for tpu_custom_call.1']
    #allocation5 [shape = 'u8[86016]{0}', space=vmem, size = 0x15000, scoped, tag = 'input window, operand 10, single buffered']
    #allocation6 [shape = 's32[1]{0}', space=sflag, size = 0x4, scoped, tag = 'scoped memory for tpu_custom_call.1']
    #allocation7 [shape = 'u8[4096]{0}', space=vmem, size = 0x1000, scoped, tag = 'output window, operand 0, single buffered']
    %16 = vsyncpa [#allocation3], 0
    %17 = vsyncpa [#allocation6], 0
    %18 = vsyncpa [#allocation4], 0
    // Predicated region
    $region2: #{tpu_custom_call.1} parent=1 // pred_check
      _
    $region3: #{tpu_custom_call.1} parent=1 // pred_check_branch
      %20 = sbr.rel (0) target = $region5
    $region4: #{tpu_custom_call.1} parent=1 // pred_region
      _
    $region5: #{tpu_custom_call.1} parent=1 // pred_fallthru
      _
    // Predicated region
    $region6: #{tpu_custom_call.1} parent=1 // pred_check
      _
    $region7: #{tpu_custom_call.1} parent=1 // pred_check_branch
      %22 = sbr.rel (0) target = $region9
    $region8: #{tpu_custom_call.1} parent=1 // pred_region
      _
    $region9: #{tpu_custom_call.1} parent=1 // pred_fallthru
      _
    // Predicated region
    $region10: #{tpu_custom_call.1} parent=1 // pred_check
      _
    $region11: #{tpu_custom_call.1} parent=1 // pred_check_branch
      %24 = sbr.rel (0) target = $region13
    $region12: #{tpu_custom_call.1} parent=1 // pred_region
      _
    $region13: #{tpu_custom_call.1} parent=1 // pred_fallthru
      _
    // Predicated region
    $region14: #{tpu_custom_call.1} parent=1 // pred_check
      _
    $region15: #{tpu_custom_call.1} parent=1 // pred_check_branch
      %26 = sbr.rel (0) target = $region17
    $region16: #{tpu_custom_call.1} parent=1 // pred_region
      _
    $region17: #{tpu_custom_call.1} parent=1 // pred_fallthru
      _
    // Predicated region
    $region18: #{tpu_custom_call.1} parent=1 // pred_check
      _
    $region19: #{tpu_custom_call.1} parent=1 // pred_check_branch
      %28 = sbr.rel (0) target = $region21
    $region20: #{tpu_custom_call.1} parent=1 // pred_region
      _
    $region21: #{tpu_custom_call.1} parent=1 // pred_fallthru
      _
    // Predicated region
    $region22: #{tpu_custom_call.1} parent=1 // pred_check
      _
    $region23: #{tpu_custom_call.1} parent=1 // pred_check_branch
      %30 = sbr.rel (0) target = $region25
    $region24: #{tpu_custom_call.1} parent=1 // pred_region
      %s32 = ssub.s32 1408, 1408
      %33 = vsyncadd [#allocation3], %s32
      %s34 = sshll.u32 [#allocation2], 4
      %s35 = int_to_ptr.vmem [resolvable:$true] %s34
      %40 = dma.hbm_to_vmem [thread:$0]  %s5, 1408, %s35, [#allocation3], 128, 128, 8
    $region25: #{tpu_custom_call.1} parent=1 // pred_fallthru
      _
    // Predicated region
    $region26: #{tpu_custom_call.1} parent=1 // pred_check
      _
    $region27: #{tpu_custom_call.1} parent=1 // pred_check_branch
      %42 = sbr.rel (0) target = $region29
    $region28: #{tpu_custom_call.1} parent=1 // pred_region
      _
    $region29: #{tpu_custom_call.1} parent=1 // pred_fallthru
      _
    // Predicated region
    $region30: #{tpu_custom_call.1} parent=1 // pred_check
      _
    $region31: #{tpu_custom_call.1} parent=1 // pred_check_branch
      %44 = sbr.rel (0) target = $region33
    $region32: #{tpu_custom_call.1} parent=1 // pred_region
      _
    $region33: #{tpu_custom_call.1} parent=1 // pred_fallthru
      _
    // Predicated region
    $region34: #{tpu_custom_call.1} parent=1 // pred_check
      _
    $region35: #{tpu_custom_call.1} parent=1 // pred_check_branch
      %46 = sbr.rel (0) target = $region37
    $region36: #{tpu_custom_call.1} parent=1 // pred_region
      _
    $region37: #{tpu_custom_call.1} parent=1 // pred_fallthru
      _
    // Predicated region
    $region38: #{tpu_custom_call.1} parent=1 // pred_check
      _
    $region39: #{tpu_custom_call.1} parent=1 // pred_check_branch
      %48 = sbr.rel (0) target = $region41
    $region40: #{tpu_custom_call.1} parent=1 // pred_region
      _
    $region41: #{tpu_custom_call.1} parent=1 // pred_fallthru
      _
    // Predicated region
    $region42: #{tpu_custom_call.1} parent=1 // pred_check
      _
    $region43: #{tpu_custom_call.1} parent=1 // pred_check_branch
      %50 = sbr.rel (0) target = $region45
    $region44: #{tpu_custom_call.1} parent=1 // pred_region
      %s52 = ssub.s32 2688, 2688
      %53 = vsyncadd [#allocation6], %s52
      %s54 = sshll.u32 [#allocation5], 4
      %s55 = int_to_ptr.vmem [resolvable:$true] %s54
      %60 = dma.hbm_to_vmem [thread:$0]  %s10, 2688, %s55, [#allocation6], 128, 128, 8
    $region45: #{tpu_custom_call.1} parent=1 // pred_fallthru
      _
    // Predicated region
    $region46: #{tpu_custom_call.1} parent=1 // pred_check
      _
    $region47: #{tpu_custom_call.1} parent=1 // pred_check_branch
      %62 = sbr.rel (0) target = $region49
    $region48: #{tpu_custom_call.1} parent=1 // pred_region
      %63 = dma.done [#allocation3], 1408
    $region49: #{tpu_custom_call.1} parent=1 // pred_fallthru
      _
    // Predicated region
    $region50: #{tpu_custom_call.1} parent=1 // pred_check
      _
    $region51: #{tpu_custom_call.1} parent=1 // pred_check_branch
      %65 = sbr.rel (0) target = $region53
    $region52: #{tpu_custom_call.1} parent=1 // pred_region
      %66 = dma.done [#allocation6], 2688
    $region53: #{tpu_custom_call.1} parent=1 // pred_fallthru
      _
    %v67 = vld [vmem:[%s0] sm:$0xf]
    %s68 = scalar_lea.vmem %s0, 4
    %v69 = vld [vmem:[%s68] sm:$0xf]
    %v70 = vmax.f32 %v67, %v69
    %s71 = scalar_lea.vmem %s0, 8
    %v72 = vld [vmem:[%s71] sm:$0xf]
    %s73 = scalar_lea.vmem %s0, 12
    %v74 = vld [vmem:[%s73] sm:$0xf]
    %v75 = vmax.f32 %v72, %v74
    %v76 = vmax.f32 %v70, %v75
    %v77 = vld [vmem:[%s1] sm:$0xff]
    %v78 = vld [vmem:[%s2] sm:$0xff]
    %v79 = vld [vmem:[%s3] sm:$0xff]
    %v80 = vld [vmem:[%s4] sm:$0xff]
    %v81 = vld [vmem:[#allocation2] sm:$0xff]
    %v82 = vld [vmem:[#allocation2 + $0x8] sm:$0xff]
    %v83 = vld [vmem:[#allocation2 + $0x10] sm:$0xff]
    %v84 = vld [vmem:[#allocation2 + $0x18] sm:$0xff]
    %v85 = vld [vmem:[#allocation2 + $0x20] sm:$0xff]
    %v86 = vld [vmem:[#allocation2 + $0x28] sm:$0xff]
    %v87 = vld [vmem:[#allocation2 + $0x30] sm:$0xff]
    %v88 = vld [vmem:[#allocation2 + $0x38] sm:$0xff]
    %v89 = vld [vmem:[#allocation2 + $0x40] sm:$0xff]
    %v90 = vld [vmem:[#allocation2 + $0x48] sm:$0xff]
    %v91 = vld [vmem:[#allocation2 + $0x50] sm:$0xf]
    %93 = vrot.lane.b32.xlu0 %v76, 25
    %v94 = vpop.permute.xlu0 %93
    %96 = vrot.lane.b32.xlu0 %v76, 24
    %v97 = vpop.permute.xlu0 %96
    %99 = vrot.lane.b32.xlu0 %v76, 23
    %v100 = vpop.permute.xlu0 %99
    %102 = vrot.lane.b32.xlu0 %v76, 17
    %v103 = vpop.permute.xlu0 %102
    %105 = vrot.lane.b32.xlu0 %v76, 16
    %v106 = vpop.permute.xlu0 %105
    %108 = vrot.lane.b32.xlu0 %v76, 15
    %v109 = vpop.permute.xlu0 %108
    %111 = vrot.lane.b32.xlu0 %v76, 9
    %v112 = vpop.permute.xlu0 %111
    %114 = vrot.lane.b32.xlu0 %v76, 8
    %v115 = vpop.permute.xlu0 %114
    %117 = vrot.lane.b32.xlu0 %v76, 7
    %v118 = vpop.permute.xlu0 %117
    %120 = vrot.lane.b32.xlu0 %v76, 1
    %v121 = vpop.permute.xlu0 %120
    %123 = vrot.lane.b32.xlu0 %v76, 127
    %v124 = vpop.permute.xlu0 %123
    %126 = vrot.lane.b32.xlu0 %v76, 121
    %v127 = vpop.permute.xlu0 %126
    %129 = vrot.lane.b32.xlu0 %v76, 120
    %v130 = vpop.permute.xlu0 %129
    %132 = vrot.lane.b32.xlu0 %v76, 119
    %v133 = vpop.permute.xlu0 %132
    %135 = vrot.lane.b32.xlu0 %v76, 113
    %v136 = vpop.permute.xlu0 %135
    %138 = vrot.lane.b32.xlu0 %v76, 112
    %v139 = vpop.permute.xlu0 %138
    %141 = vrot.lane.b32.xlu0 %v76, 111
    %v142 = vpop.permute.xlu0 %141
    %144 = vrot.lane.b32.xlu0 %v76, 105
    %v145 = vpop.permute.xlu0 %144
    %147 = vrot.lane.b32.xlu0 %v76, 104
    %v148 = vpop.permute.xlu0 %147
    %150 = vrot.lane.b32.xlu0 %v76, 103
    %v151 = vpop.permute.xlu0 %150
    %v154 = vrot.slane %v97, 4
    %v157 = vrot.slane %v103, 4
    %v160 = vrot.slane %v109, 4
    %v163 = vrot.slane %v115, 4
    %v166 = vrot.slane %v121, 4
    %v169 = vrot.slane %v124, 4
    %v172 = vrot.slane %v130, 4
    %v175 = vrot.slane %v136, 4
    %vm177 = vcmask 1043456
    %v178 = vsel %vm177, %v94, %v154
    %v179 = vsel %vm177, %v100, %v157
    %v180 = vsel %vm177, %v106, %v160
    %v181 = vsel %vm177, %v112, %v163
    %v182 = vsel %vm177, %v118, %v166
    %v183 = vsel %vm177, %v76, %v169
    %v184 = vsel %vm177, %v127, %v172
    %v185 = vsel %vm177, %v133, %v175
    %v187 = vrot.slane %v142, 4
    %v190 = vrot.slane %v148, 4
    %v192 = vsel %vm177, %v139, %v187
    %v193 = vsel %vm177, %v145, %v190
    %v194 = vmul.f32 %v178, %v81
    %v195 = vmul.f32 %v179, %v82
    %v196 = vmul.f32 %v180, %v83
    %v197 = vmul.f32 %v181, %v84
    %v198 = vmul.f32 %v182, %v85
    %v199 = vmul.f32 %v183, %v86
    %v200 = vmul.f32 %v184, %v87
    %v201 = vmul.f32 %v185, %v88
    %v202 = vmul.f32 %v192, %v89
    %v203 = vmul.f32 %v193, %v90
    %v204 = vmul.f32 %v151, %v91
    %206 = vset.pattern.permute.xlu0 0
    %207 = vperm.xlu0 %206, %v78
    %v208 = vpop.permute.xlu0 %207
    %vm210 = vcmask 687104
    %v212 = vsel %vm210, %v77, 0
    %v215 = vsel %vm177, %v204, 0
    %217 = vmatprep.subr.mxu0 0.0
    %218 = vmatpush1.msra.mxu0 %v194
    %219 = vmatprep.subr.mxu0 0.0
    %220 = vmatpush1.msra.mxu0 %v195
    %221 = vmatprep.subr.mxu0 0.0
    %222 = vmatpush1.msra.mxu0 %v196
    %223 = vmatprep.subr.mxu0 0.0
    %224 = vmatpush1.msra.mxu0 %v197
    %225 = vmatprep.subr.mxu0 0.0
    %226 = vmatpush1.msra.mxu0 %v198
    %227 = vmatprep.subr.mxu0 0.0
    %228 = vmatpush1.msra.mxu0 %v199
    %229 = vmatprep.subr.mxu0 0.0
    %230 = vmatpush1.msra.mxu0 %v200
    %231 = vmatprep.subr.mxu0 0.0
    %232 = vmatpush1.msra.mxu0 %v201
    %233 = vmatprep.subr.mxu0 0.0
    %234 = vmatpush1.msra.mxu0 %v202
    %235 = vmatprep.subr.mxu0 0.0
    %236 = vmatpush1.msra.mxu0 %v203
    %237 = vmatprep.subr.mxu0 0.0
    %238 = vmatpush1.msra.mxu0 %v215
    %239 = vmatprep.subr.mxu0 0.0
    %240 = vmatpush1.msra.mxu0 0.0
    %241 = vmatprep.subr.mxu0 0.0
    %242 = vmatpush1.msra.mxu0 0.0
    %243 = vmatprep.subr.mxu0 0.0
    %244 = vmatpush1.msra.mxu0 0.0
    %245 = vmatprep.subr.mxu0 0.0
    %246 = vmatpush1.msra.mxu0 0.0
    %247 = vmatprep.subr.mxu0 0.0
    %248 = vmatpush1.msra.mxu0 0.0
    %249 = vmatprep.subr.mxu0 0.0
    %250 = vmatpush1.msra.mxu0 0.0
    %251 = vmatprep.subr.mxu0 0.0
    %252 = vmatpush1.msra.mxu0 0.0
    %253 = vmatprep.subr.mxu0 0.0
    %254 = vmatpush1.msra.mxu0 0.0
    %255 = vmatprep.subr.mxu0 0.0
    %256 = vmatpush1.msra.mxu0 0.0
    %257 = vmatprep.subr.mxu0 0.0
    %258 = vmatpush1.msra.mxu0 0.0
    %259 = vmatprep.subr.mxu0 0.0
    %260 = vmatpush1.msra.mxu0 0.0
    %261 = vmatprep.subr.mxu0 0.0
    %262 = vmatpush1.msra.mxu0 0.0
    %263 = vmatprep.subr.mxu0 0.0
    %264 = vmatpush1.msra.mxu0 0.0
    %265 = vmatprep.subr.mxu0 0.0
    %266 = vmatpush1.msra.mxu0 0.0
    %267 = vmatprep.subr.mxu0 0.0
    %268 = vmatpush1.msra.mxu0 0.0
    %269 = vmatprep.subr.mxu0 0.0
    %270 = vmatpush1.msra.mxu0 0.0
    %271 = vmatprep.subr.mxu0 0.0
    %272 = vmatpush1.msra.mxu0 0.0
    %273 = vmatprep.subr.mxu0 0.0
    %274 = vmatpush1.msra.mxu0 0.0
    %275 = vmatprep.subr.mxu0 0.0
    %276 = vmatpush1.msra.mxu0 0.0
    %277 = vmatprep.subr.mxu0 0.0
    %278 = vmatpush1.msra.mxu0 0.0
    %279 = vmatprep.subr.mxu0 0.0
    %280 = vmatpush1.msra.mxu0 0.0
    %281 = vmatprep.mubr.f32.mxu0 0.0
    %282 = vmatmul.mubr.f32.gmra.mrb[0].mxu0 %v212
    %v283 = vpop.f32.mrb[0].mxu0
    %v284 = vadd.f32 %v208, %v283
    %v285 = vpop.f32.mrb[0].mxu0
    %286 = vdwg.mxu0
    %287 = vadd.xlane.f32.xlu0 %v284
    %v288 = vpop.xlane.xlu0 %287
    %v289 = vrcp.pop 128.0
    %v290 = vmul.f32 %v288, %v289
    %v291 = vsub.f32 %v284, %v290
    %v292 = vmul.f32 %v291, %v291
    %293 = vadd.xlane.f32.xlu0 %v292
    %v294 = vpop.xlane.xlu0 %293
    %v295 = vmul.f32 %v294, %v289
    %v296 = vadd.f32 %v295, 1e-05
    %v297 = vrsqrt.pop %v296
    %v298 = vmul.f32 %v79, %v297
    %300 = vset.pattern.permute.xlu0 0
    %301 = vperm.xlu0 %300, %v298
    %v302 = vpop.permute.xlu0 %301
    %v304 = vmul.f32 %v291, %v302
    %306 = vset.pattern.permute.xlu0 0
    %307 = vperm.xlu0 %306, %v80
    %v308 = vpop.permute.xlu0 %307
    %v310 = vadd.f32 %v304, %v308
    %v311 = vmax.f32 %v310, 0.0
    %v312 = vld [vmem:[%s6] sm:$0xff]
    %v313 = vld [vmem:[%s6 + $0x8] sm:$0xff]
    %v314 = vld [vmem:[%s7] sm:$0xff]
    %v315 = vld [vmem:[%s8] sm:$0xff]
    %v316 = vld [vmem:[%s9] sm:$0xff]
    %v317 = vld [vmem:[#allocation5] sm:$0xff]
    %v318 = vld [vmem:[#allocation5 + $0x8] sm:$0xff]
    %v319 = vld [vmem:[#allocation5 + $0x10] sm:$0xff]
    %v320 = vld [vmem:[#allocation5 + $0x18] sm:$0xff]
    %v321 = vld [vmem:[#allocation5 + $0x20] sm:$0xff]
    %v322 = vld [vmem:[#allocation5 + $0x28] sm:$0xff]
    %v323 = vld [vmem:[#allocation5 + $0x30] sm:$0xff]
    %v324 = vld [vmem:[#allocation5 + $0x38] sm:$0xff]
    %v325 = vld [vmem:[#allocation5 + $0x40] sm:$0xff]
    %v326 = vld [vmem:[#allocation5 + $0x48] sm:$0xff]
    %v327 = vld [vmem:[#allocation5 + $0x50] sm:$0xff]
    %v328 = vld [vmem:[#allocation5 + $0x58] sm:$0xff]
    %v329 = vld [vmem:[#allocation5 + $0x60] sm:$0xff]
    %v330 = vld [vmem:[#allocation5 + $0x68] sm:$0xff]
    %v331 = vld [vmem:[#allocation5 + $0x70] sm:$0xff]
    %v332 = vld [vmem:[#allocation5 + $0x78] sm:$0xff]
    %v333 = vld [vmem:[#allocation5 + $0x80] sm:$0xff]
    %v334 = vld [vmem:[#allocation5 + $0x88] sm:$0xff]
    %v335 = vld [vmem:[#allocation5 + $0x90] sm:$0xff]
    %v336 = vld [vmem:[#allocation5 + $0x98] sm:$0xff]
    %v337 = vld [vmem:[#allocation5 + $0xa0] sm:$0xff]
    %339 = vrot.lane.b32.xlu0 %v311, 25
    %v340 = vpop.permute.xlu0 %339
    %342 = vrot.lane.b32.xlu0 %v311, 24
    %v343 = vpop.permute.xlu0 %342
    %345 = vrot.lane.b32.xlu0 %v311, 23
    %v346 = vpop.permute.xlu0 %345
    %348 = vrot.lane.b32.xlu0 %v311, 17
    %v349 = vpop.permute.xlu0 %348
    %351 = vrot.lane.b32.xlu0 %v311, 16
    %v352 = vpop.permute.xlu0 %351
    %354 = vrot.lane.b32.xlu0 %v311, 15
    %v355 = vpop.permute.xlu0 %354
    %357 = vrot.lane.b32.xlu0 %v311, 9
    %v358 = vpop.permute.xlu0 %357
    %360 = vrot.lane.b32.xlu0 %v311, 8
    %v361 = vpop.permute.xlu0 %360
    %363 = vrot.lane.b32.xlu0 %v311, 7
    %v364 = vpop.permute.xlu0 %363
    %366 = vrot.lane.b32.xlu0 %v311, 1
    %v367 = vpop.permute.xlu0 %366
    %369 = vrot.lane.b32.xlu0 %v311, 127
    %v370 = vpop.permute.xlu0 %369
    %372 = vrot.lane.b32.xlu0 %v311, 121
    %v373 = vpop.permute.xlu0 %372
    %375 = vrot.lane.b32.xlu0 %v311, 120
    %v376 = vpop.permute.xlu0 %375
    %378 = vrot.lane.b32.xlu0 %v311, 119
    %v379 = vpop.permute.xlu0 %378
    %381 = vrot.lane.b32.xlu0 %v311, 113
    %v382 = vpop.permute.xlu0 %381
    %384 = vrot.lane.b32.xlu0 %v311, 112
    %v385 = vpop.permute.xlu0 %384
    %387 = vrot.lane.b32.xlu0 %v311, 111
    %v388 = vpop.permute.xlu0 %387
    %390 = vrot.lane.b32.xlu0 %v311, 105
    %v391 = vpop.permute.xlu0 %390
    %393 = vrot.lane.b32.xlu0 %v311, 104
    %v394 = vpop.permute.xlu0 %393
    %396 = vrot.lane.b32.xlu0 %v311, 103
    %v397 = vpop.permute.xlu0 %396
    %v399 = vmul.f32 %v340, %v317
    %v400 = vmul.f32 %v343, %v318
    %v401 = vmul.f32 %v346, %v319
    %v402 = vmul.f32 %v349, %v320
    %v403 = vmul.f32 %v352, %v321
    %v404 = vmul.f32 %v355, %v322
    %v405 = vmul.f32 %v358, %v323
    %v406 = vmul.f32 %v361, %v324
    %v407 = vmul.f32 %v364, %v325
    %v408 = vmul.f32 %v367, %v326
    %v409 = vmul.f32 %v311, %v327
    %v410 = vmul.f32 %v370, %v328
    %v411 = vmul.f32 %v373, %v329
    %v412 = vmul.f32 %v376, %v330
    %v413 = vmul.f32 %v379, %v331
    %v414 = vmul.f32 %v382, %v332
    %v415 = vmul.f32 %v385, %v333
    %v416 = vmul.f32 %v388, %v334
    %v417 = vmul.f32 %v391, %v335
    %v418 = vmul.f32 %v394, %v336
    %v419 = vmul.f32 %v397, %v337
    %421 = vset.pattern.permute.xlu0 0
    %422 = vperm.xlu0 %421, %v314
    %v423 = vpop.permute.xlu0 %422
    %vm425 = vcmask 326656
    %v427 = vsel %vm425, %v313, 0
    %429 = vmatprep.subr.mxu0 0.0
    %430 = vmatpush1.msra.mxu0 %v399
    %431 = vmatprep.subr.mxu0 0.0
    %432 = vmatpush1.msra.mxu0 %v400
    %433 = vmatprep.subr.mxu0 0.0
    %434 = vmatpush1.msra.mxu0 %v401
    %435 = vmatprep.subr.mxu0 0.0
    %436 = vmatpush1.msra.mxu0 %v402
    %437 = vmatprep.subr.mxu0 0.0
    %438 = vmatpush1.msra.mxu0 %v403
    %439 = vmatprep.subr.mxu0 0.0
    %440 = vmatpush1.msra.mxu0 %v404
    %441 = vmatprep.subr.mxu0 0.0
    %442 = vmatpush1.msra.mxu0 %v405
    %443 = vmatprep.subr.mxu0 0.0
    %444 = vmatpush1.msra.mxu0 %v406
    %445 = vmatprep.subr.mxu0 0.0
    %446 = vmatpush1.msra.mxu0 %v407
    %447 = vmatprep.subr.mxu0 0.0
    %448 = vmatpush1.msra.mxu0 %v408
    %449 = vmatprep.subr.mxu0 0.0
    %450 = vmatpush1.msra.mxu0 %v409
    %451 = vmatprep.subr.mxu0 0.0
    %452 = vmatpush1.msra.mxu0 %v410
    %453 = vmatprep.subr.mxu0 0.0
    %454 = vmatpush1.msra.mxu0 %v411
    %455 = vmatprep.subr.mxu0 0.0
    %456 = vmatpush1.msra.mxu0 %v412
    %457 = vmatprep.subr.mxu0 0.0
    %458 = vmatpush1.msra.mxu0 %v413
    %459 = vmatprep.subr.mxu0 0.0
    %460 = vmatpush1.msra.mxu0 %v414
    %461 = vmatprep.subr.mxu0 0.0
    %462 = vmatpush1.msra.mxu0 %v415
    %463 = vmatprep.subr.mxu0 0.0
    %464 = vmatpush1.msra.mxu0 %v416
    %465 = vmatprep.subr.mxu0 0.0
    %466 = vmatpush1.msra.mxu0 %v417
    %467 = vmatprep.subr.mxu0 0.0
    %468 = vmatpush1.msra.mxu0 %v418
    %469 = vmatprep.subr.mxu0 0.0
    %470 = vmatpush1.msra.mxu0 %v419
    %471 = vmatprep.subr.mxu0 0.0
    %472 = vmatpush1.msra.mxu0 0.0
    %473 = vmatprep.subr.mxu0 0.0
    %474 = vmatpush1.msra.mxu0 0.0
    %475 = vmatprep.subr.mxu0 0.0
    %476 = vmatpush1.msra.mxu0 0.0
    %477 = vmatprep.subr.mxu0 0.0
    %478 = vmatpush1.msra.mxu0 0.0
    %479 = vmatprep.subr.mxu0 0.0
    %480 = vmatpush1.msra.mxu0 0.0
    %481 = vmatprep.subr.mxu0 0.0
    %482 = vmatpush1.msra.mxu0 0.0
    %483 = vmatprep.subr.mxu0 0.0
    %484 = vmatpush1.msra.mxu0 0.0
    %485 = vmatprep.subr.mxu0 0.0
    %486 = vmatpush1.msra.mxu0 0.0
    %487 = vmatprep.subr.mxu0 0.0
    %488 = vmatpush1.msra.mxu0 0.0
    %489 = vmatprep.subr.mxu0 0.0
    %490 = vmatpush1.msra.mxu0 0.0
    %491 = vmatprep.subr.mxu0 0.0
    %492 = vmatpush1.msra.mxu0 0.0
    %493 = vmatprep.mubr.f32.mxu0 %v427
    %494 = vmatmul.mubr.f32.gmra.mrb[0].mxu0 %v312
    %v495 = vpop.f32.mrb[0].mxu0
    %v496 = vadd.f32 %v423, %v495
    %v497 = vpop.f32.mrb[0].mxu0
    %498 = vdwg.mxu0
    %499 = vadd.xlane.f32.xlu0 %v496
    %v500 = vpop.xlane.xlu0 %499
    %v501 = vmul.f32 %v500, %v289
    %v502 = vsub.f32 %v496, %v501
    %v503 = vmul.f32 %v502, %v502
    %504 = vadd.xlane.f32.xlu0 %v503
    %v505 = vpop.xlane.xlu0 %504
    %v506 = vmul.f32 %v505, %v289
    %v507 = vadd.f32 %v506, 1e-05
    %v508 = vrsqrt.pop %v507
    %v509 = vmul.f32 %v315, %v508
    %511 = vset.pattern.permute.xlu0 0
    %512 = vperm.xlu0 %511, %v509
    %v513 = vpop.permute.xlu0 %512
    %v515 = vmul.f32 %v502, %v513
    %517 = vset.pattern.permute.xlu0 0
    %518 = vperm.xlu0 %517, %v316
    %v519 = vpop.permute.xlu0 %518
    %v521 = vadd.f32 %v515, %v519
    %v522 = vmax.f32 %v521, 0.0
    %523 = vst [vmem:[#allocation7] sm:$0xff] %v522
    // Predicated region
    $region54: #{tpu_custom_call.1} parent=1 // pred_check
      _
    $region55: #{tpu_custom_call.1} parent=1 // pred_check_branch
      %525 = sbr.rel (0) target = $region57
    $region56: #{tpu_custom_call.1} parent=1 // pred_region
      %s527 = ssub.s32 128, 128
      %528 = vsyncadd [#allocation4], %s527
      %s530 = sshll.u32 [#allocation7], 4
      %s531 = int_to_ptr.vmem [resolvable:$true] %s530
      %533 = dma.vmem_to_hbm [thread:$0]  %s531, 128, %s11, [#allocation4]
    $region57: #{tpu_custom_call.1} parent=1 // pred_fallthru
      _
    // Predicated region
    $region58: #{tpu_custom_call.1} parent=1 // pred_check
      _
    $region59: #{tpu_custom_call.1} parent=1 // pred_check_branch
      %535 = sbr.rel (0) target = $region61
    $region60: #{tpu_custom_call.1} parent=1 // pred_region
      %536 = dma.done [#allocation4], 128
    $region61: #{tpu_custom_call.1} parent=1 // pred_fallthru
      _
    %537 = vsyncpa [#allocation3], 1
    %538 = vsyncpa [#allocation6], 1
    %539 = vsyncpa [#allocation4], 1

</llo_original>
